<compile_context>
chip_gen: v5e
topology: v5e:2x2
jax: 0.10.0
libtpu: 0.0.40
codegen_flags: <defaults>
</compile_context>

<pallas_src>
import functools
import math

import jax
import jax.numpy as jnp
from jax.experimental import pallas as pl
from jax.experimental.pallas import tpu as pltpu


_MASK_NEG = float(jnp.finfo(jnp.float32).min)  # finite sentinel instead of -inf (no NaN risk)


def _time_encoder_kernel(time_ref, q_ref, mask_ref, w_sel_ref, b_sel_ref,
                         wt_ref, b_w_ref, out_ref, *, bt, s):
    # time_ref: (bt*s, 1)   seq_time_step rows
    # q_ref:    (bt*s, h)   final_queries broadcast to one row per (batch, step)
    # mask_ref: (bt, s)     1.0 => masked
    # w_sel_ref/b_sel_ref/b_w_ref: (1, h); wt_ref: (h, h) pre-transposed weight_layer
    h = q_ref.shape[-1]

    # selection_layer(Linear(1, H)) on (t / 180): broadcast outer product on the VPU.
    t = time_ref[...] / 180.0                                   # (bt*s, 1)
    x = t * w_sel_ref[...] + b_sel_ref[...]                     # (bt*s, h)
    f = 1.0 - jnp.tanh(x * x)                                   # 1 - tanh(z^2)

    # weight_layer: one big MXU matmul per grid step (weight already transposed).
    g = jnp.dot(f, wt_ref[...],
                precision=jax.lax.Precision.HIGHEST,
                preferred_element_type=jnp.float32) + b_w_ref[...]
    g = jnp.maximum(g, 0.0)                                     # ReLU

    # score[b, s] = sum_h g * q, then /8.  Split leading rows back into (bt, s, h)
    # (s is a multiple of 8 in the intended configs, so this is layout-free) and
    # reduce over the lane axis; result is a lane-dense (bt, s) tile.
    prod = g * q_ref[...]                                       # (bt*s, h)
    score = jnp.sum(prod.reshape(bt, s, h), axis=2) * 0.125     # (bt, s)

    # masked_fill_(mask, -inf) with a finite sentinel (identical probabilities).
    score = jnp.where(mask_ref[...] != 0.0, _MASK_NEG, score)

    # softmax over the sequence axis (dim=1 of the torch [B, S, 1] tensor).
    m = jnp.max(score, axis=-1, keepdims=True)
    p = jnp.exp(score - m)
    denom = jnp.sum(p, axis=-1, keepdims=True)
    out_ref[...] = (p * pl.reciprocal(denom, approx=False)).astype(out_ref.dtype)


def _pick_batch_tile(b, s, h, bytes_budget=8 * 1024 * 1024):
    # Group several batches per grid step to amortize per-step overhead, while
    # keeping the (Bt*S, H) q-slab well under the VMEM budget (double-buffered).
    for cand in (128, 64, 32, 16, 8):
        if b % cand == 0 and cand * s * h * 4 <= bytes_budget:
            return cand
    return b  # small / awkward B: single grid step covering all batches


def time_encoder_forward(seq_time_step, final_queries, mask,
                         selection_weight, selection_bias,
                         weight_weight, weight_bias, options=None):
    """Pallas TPU forward of TimeEncoder.

    seq_time_step:    [B, S]
    final_queries:    [B, 1, H] or [B, S, H]
    mask:             [B, S, 1] (bool / int), nonzero => masked
    selection_weight: [H, 1]  (torch Linear(1, H).weight)
    selection_bias:   [H]
    weight_weight:    [H, H]  (torch Linear(H, H).weight)
    weight_bias:      [H]
    Returns the softmax weights [B, S, 1] (float32).
    """
    del options  # unused by the torch forward as well
    B, S = seq_time_step.shape
    H = selection_weight.shape[0]

    q = jnp.broadcast_to(final_queries.astype(jnp.float32), (B, S, H))

    time2 = seq_time_step.astype(jnp.float32).reshape(B * S, 1)
    q2 = q.reshape(B * S, H)
    mask2 = (mask.reshape(B, S) != 0).astype(jnp.float32)

    w_sel = selection_weight.astype(jnp.float32).reshape(1, H)   # (H,1) -> row vector
    b_sel = selection_bias.astype(jnp.float32).reshape(1, H)
    wt = weight_weight.astype(jnp.float32).T                     # pre-transpose: f @ W^T == f @ wt
    b_w = weight_bias.astype(jnp.float32).reshape(1, H)

    Bt = _pick_batch_tile(B, S, H)
    grid = (B // Bt,)

    kernel = functools.partial(_time_encoder_kernel, bt=Bt, s=S)

    out = pl.pallas_call(
        kernel,
        out_shape=jax.ShapeDtypeStruct((B, S), jnp.float32),
        grid=grid,
        in_specs=[
            pl.BlockSpec((Bt * S, 1), lambda i: (i, 0)),   # seq_time_step rows
            pl.BlockSpec((Bt * S, H), lambda i: (i, 0)),   # broadcast queries
            pl.BlockSpec((Bt, S), lambda i: (i, 0)),       # mask
            pl.BlockSpec((1, H), lambda i: (0, 0)),        # selection weight (resident)
            pl.BlockSpec((1, H), lambda i: (0, 0)),        # selection bias
            pl.BlockSpec((H, H), lambda i: (0, 0)),        # weight_layer (transposed)
            pl.BlockSpec((1, H), lambda i: (0, 0)),        # weight_layer bias
        ],
        out_specs=pl.BlockSpec((Bt, S), lambda i: (i, 0)),  # lane-dense along S
        compiler_params=pltpu.CompilerParams(
            dimension_semantics=("parallel",),
            vmem_limit_bytes=32 * 1024 * 1024,
        ),
    )(time2, q2, mask2, w_sel, b_sel, wt, b_w)

    return out.reshape(B, S, 1)


def _reference(seq_time_step, final_queries, mask,
               selection_weight, selection_bias, weight_weight, weight_bias):
    """Pure-JAX mirror of the torch forward (fp32)."""
    t = seq_time_step.astype(jnp.float32)[:, :, None] / 180.0                 # [B,S,1]
    w_sel = selection_weight.astype(jnp.float32)[:, 0]                        # [H]
    x = t * w_sel[None, None, :] + selection_bias.astype(jnp.float32)         # Linear(1,H)
    f = 1.0 - jnp.tanh(x * x)
    g = jax.nn.relu(
        jnp.einsum("bsh,kh->bsk", f, weight_weight.astype(jnp.float32),
                   precision=jax.lax.Precision.HIGHEST)
        + weight_bias.astype(jnp.float32))
    score = jnp.sum(g * final_queries.astype(jnp.float32), axis=2, keepdims=True) / 8.0
    score = jnp.where(mask, -jnp.inf, score)
    return jax.nn.softmax(score, axis=1)


if __name__ == "__main__":
    key = jax.random.PRNGKey(0)
    k_t, k_q, k_w1, k_b1, k_w2, k_b2 = jax.random.split(key, 6)

    B, S, H = 2, 8, 32  # batch=2, seq=8, hidden=32

    seq_time_step = jax.random.uniform(k_t, (B, S), dtype=jnp.float32,
                                       minval=0.0, maxval=365.0)
    final_queries = jax.random.normal(k_q, (B, 1, H), dtype=jnp.float32)

    # batch 0 masks its last two timesteps, batch 1 masks none (no fully-masked rows).
    valid_lens = jnp.array([6, 8])
    mask = jnp.arange(S)[None, :, None] >= valid_lens[:, None, None]          # [B,S,1] bool

    selection_weight = jax.random.normal(k_w1, (H, 1), dtype=jnp.float32) * 0.5
    selection_bias = jax.random.normal(k_b1, (H,), dtype=jnp.float32) * 0.1
    weight_weight = jax.random.normal(k_w2, (H, H), dtype=jnp.float32) * (1.0 / math.sqrt(H))
    weight_bias = jax.random.normal(k_b2, (H,), dtype=jnp.float32) * 0.1

    out = time_encoder_forward(seq_time_step, final_queries, mask,
                               selection_weight, selection_bias,
                               weight_weight, weight_bias)
    jax.block_until_ready(out)

    ref = _reference(seq_time_step, final_queries, mask,
                     selection_weight, selection_bias, weight_weight, weight_bias)

    assert out.shape == (B, S, 1)
    assert jnp.allclose(out, ref, atol=1e-4, rtol=1e-4), float(jnp.max(jnp.abs(out - ref)))
    assert jnp.allclose(jnp.sum(out, axis=1), 1.0, atol=1e-5)  # valid distribution over S
    assert jnp.all(out[0, 6:, 0] == 0.0)                        # masked steps get 0 weight

    print("KERNEL_OK")
</pallas_src>

<mosaic_0001>
module attributes {stable_mosaic.version = 11 : i64} {
  func.func @_time_encoder_kernel(%arg0: i32, %arg1: memref<16x1xf32, #tpu.memory_space<vmem>>, %arg2: memref<16x32xf32, #tpu.memory_space<vmem>>, %arg3: memref<2x8xf32, #tpu.memory_space<vmem>>, %arg4: memref<1x32xf32, #tpu.memory_space<vmem>>, %arg5: memref<1x32xf32, #tpu.memory_space<vmem>>, %arg6: memref<32x32xf32, #tpu.memory_space<vmem>>, %arg7: memref<1x32xf32, #tpu.memory_space<vmem>>, %arg8: memref<2x8xf32, #tpu.memory_space<vmem>>) attributes {dimension_semantics = [#tpu.dimension_semantics<parallel>], iteration_bounds = array<i64: 1>, scalar_prefetch = 0 : i64, scratch_operands = 0 : i64, tpu.core_type = #tpu.core_type<tc>, window_params = [{transform_indices = @transform_0, window_bounds = array<i64: 16, 1>}, {transform_indices = @transform_1, window_bounds = array<i64: 16, 32>}, {transform_indices = @transform_2, window_bounds = array<i64: 2, 8>}, {pipeline_mode = #tpu.pipeline_mode<synchronous>, transform_indices = @transform_3, window_bounds = array<i64: 1, 32>}, {pipeline_mode = #tpu.pipeline_mode<synchronous>, transform_indices = @transform_4, window_bounds = array<i64: 1, 32>}, {pipeline_mode = #tpu.pipeline_mode<synchronous>, transform_indices = @transform_5, window_bounds = array<i64: 32, 32>}, {pipeline_mode = #tpu.pipeline_mode<synchronous>, transform_indices = @transform_6, window_bounds = array<i64: 1, 32>}, {transform_indices = @transform_7, window_bounds = array<i64: 2, 8>}]} {
    %c0 = arith.constant 0 : index
    %c0_0 = arith.constant 0 : index
    %0 = vector.load %arg1[%c0, %c0_0] : memref<16x1xf32, #tpu.memory_space<vmem>>, vector<16x1xf32>
    %cst = arith.constant 1.800000e+02 : f32
    %1 = vector.broadcast %cst : f32 to vector<16x1xf32>
    %2 = arith.divf %0, %1 : vector<16x1xf32>
    %c0_1 = arith.constant 0 : index
    %c0_2 = arith.constant 0 : index
    %3 = vector.load %arg4[%c0_1, %c0_2] : memref<1x32xf32, #tpu.memory_space<vmem>>, vector<1x32xf32>
    %4 = vector.broadcast %2 : vector<16x1xf32> to vector<16x32xf32>
    %5 = vector.broadcast %3 : vector<1x32xf32> to vector<16x32xf32>
    %6 = arith.mulf %4, %5 : vector<16x32xf32>
    %c0_3 = arith.constant 0 : index
    %c0_4 = arith.constant 0 : index
    %7 = vector.load %arg5[%c0_3, %c0_4] : memref<1x32xf32, #tpu.memory_space<vmem>>, vector<1x32xf32>
    %8 = vector.broadcast %7 : vector<1x32xf32> to vector<16x32xf32>
    %9 = arith.addf %6, %8 : vector<16x32xf32>
    %10 = arith.mulf %9, %9 : vector<16x32xf32>
    %11 = math.tanh %10 : vector<16x32xf32>
    %cst_5 = arith.constant 1.000000e+00 : f32
    %12 = vector.broadcast %cst_5 : f32 to vector<16x32xf32>
    %13 = arith.subf %12, %11 : vector<16x32xf32>
    %c0_6 = arith.constant 0 : index
    %c0_7 = arith.constant 0 : index
    %14 = vector.load %arg6[%c0_6, %c0_7] : memref<32x32xf32, #tpu.memory_space<vmem>>, vector<32x32xf32>
    %cst_8 = arith.constant dense<0.000000e+00> : vector<16x32xf32>
    %15 = tpu.matmul %13, %14, %cst_8 {dimension_numbers = #tpu.dot_dimension_numbers<[1], [0], [0], [1], [0, 0, 1, 1], [], []>, precision = #tpu.contract_precision<fp32>} : vector<16x32xf32>, vector<32x32xf32>, vector<16x32xf32> -> vector<16x32xf32>
    %c0_9 = arith.constant 0 : index
    %c0_10 = arith.constant 0 : index
    %16 = vector.load %arg7[%c0_9, %c0_10] : memref<1x32xf32, #tpu.memory_space<vmem>>, vector<1x32xf32>
    %17 = vector.broadcast %16 : vector<1x32xf32> to vector<16x32xf32>
    %18 = arith.addf %15, %17 : vector<16x32xf32>
    %cst_11 = arith.constant 0.000000e+00 : f32
    %19 = vector.broadcast %cst_11 : f32 to vector<16x32xf32>
    %20 = arith.maximumf %18, %19 : vector<16x32xf32>
    %c0_12 = arith.constant 0 : index
    %c0_13 = arith.constant 0 : index
    %21 = vector.load %arg2[%c0_12, %c0_13] : memref<16x32xf32, #tpu.memory_space<vmem>>, vector<16x32xf32>
    %22 = arith.mulf %20, %21 : vector<16x32xf32>
    %23 = vector.shape_cast %22 : vector<16x32xf32> to vector<2x8x32xf32>
    %cst_14 = arith.constant dense<0.000000e+00> : vector<2x8xf32>
    %24 = vector.multi_reduction <add>, %23, %cst_14 [2] : vector<2x8x32xf32> to vector<2x8xf32>
    %cst_15 = arith.constant 1.250000e-01 : f32
    %25 = vector.broadcast %cst_15 : f32 to vector<2x8xf32>
    %26 = arith.mulf %24, %25 : vector<2x8xf32>
    %c0_16 = arith.constant 0 : index
    %c0_17 = arith.constant 0 : index
    %27 = vector.load %arg3[%c0_16, %c0_17] : memref<2x8xf32, #tpu.memory_space<vmem>>, vector<2x8xf32>
    %cst_18 = arith.constant 0.000000e+00 : f32
    %28 = vector.broadcast %cst_18 : f32 to vector<2x8xf32>
    %29 = arith.cmpf one, %27, %28 : vector<2x8xf32>
    %cst_19 = arith.constant -3.40282347E+38 : f32
    %30 = vector.broadcast %cst_19 : f32 to vector<2x8xf32>
    %31 = arith.select %29, %30, %26 : vector<2x8xi1>, vector<2x8xf32>
    %cst_20 = arith.constant dense<0xFF800000> : vector<2xf32>
    %32 = vector.multi_reduction <maximumf>, %31, %cst_20 [1] : vector<2x8xf32> to vector<2xf32>
    %33 = vector.shape_cast %32 : vector<2xf32> to vector<2x1xf32>
    %34 = vector.broadcast %33 : vector<2x1xf32> to vector<2x8xf32>
    %35 = arith.subf %31, %34 : vector<2x8xf32>
    %36 = math.exp %35 : vector<2x8xf32>
    %cst_21 = arith.constant dense<0.000000e+00> : vector<2xf32>
    %37 = vector.multi_reduction <add>, %36, %cst_21 [1] : vector<2x8xf32> to vector<2xf32>
    %38 = vector.shape_cast %37 : vector<2xf32> to vector<2x1xf32>
    %39 = tpu.reciprocal %38 : vector<2x1xf32> -> vector<2x1xf32>
    %40 = vector.broadcast %39 : vector<2x1xf32> to vector<2x8xf32>
    %41 = arith.mulf %36, %40 : vector<2x8xf32>
    %c0_22 = arith.constant 0 : index
    %c0_23 = arith.constant 0 : index
    %42 = vector.load %arg8[%c0_22, %c0_23] : memref<2x8xf32, #tpu.memory_space<vmem>>, vector<2x8xf32>
    tpu.vector_store %arg8[%c0_22, %c0_23], %41 {strides = array<i32>} : memref<2x8xf32, #tpu.memory_space<vmem>>, vector<2x8xf32>,
    return
  }
  func.func @transform_0(%arg0: i32) -> (i32, i32) {
    %c0_i32 = arith.constant 0 : i32
    %c0_i32_0 = arith.constant 0 : i32
    return %arg0, %c0_i32 : i32, i32
  }
  func.func @transform_1(%arg0: i32) -> (i32, i32) {
    %c0_i32 = arith.constant 0 : i32
    %c0_i32_0 = arith.constant 0 : i32
    return %arg0, %c0_i32 : i32, i32
  }
  func.func @transform_2(%arg0: i32) -> (i32, i32) {
    %c0_i32 = arith.constant 0 : i32
    %c0_i32_0 = arith.constant 0 : i32
    return %arg0, %c0_i32 : i32, i32
  }
  func.func @transform_3(%arg0: i32) -> (i32, i32) {
    %c0_i32 = arith.constant 0 : i32
    %c0_i32_0 = arith.constant 0 : i32
    %c0_i32_1 = arith.constant 0 : i32
    return %c0_i32, %c0_i32_0 : i32, i32
  }
  func.func @transform_4(%arg0: i32) -> (i32, i32) {
    %c0_i32 = arith.constant 0 : i32
    %c0_i32_0 = arith.constant 0 : i32
    %c0_i32_1 = arith.constant 0 : i32
    return %c0_i32, %c0_i32_0 : i32, i32
  }
  func.func @transform_5(%arg0: i32) -> (i32, i32) {
    %c0_i32 = arith.constant 0 : i32
    %c0_i32_0 = arith.constant 0 : i32
    %c0_i32_1 = arith.constant 0 : i32
    return %c0_i32, %c0_i32_0 : i32, i32
  }
  func.func @transform_6(%arg0: i32) -> (i32, i32) {
    %c0_i32 = arith.constant 0 : i32
    %c0_i32_0 = arith.constant 0 : i32
    %c0_i32_1 = arith.constant 0 : i32
    return %c0_i32, %c0_i32_0 : i32, i32
  }
  func.func @transform_7(%arg0: i32) -> (i32, i32) {
    %c0_i32 = arith.constant 0 : i32
    %c0_i32_0 = arith.constant 0 : i32
    return %arg0, %c0_i32 : i32, i32
  }
}

</mosaic_0001>

<llo_original>
// kernel: tpu_custom_call.1
$region0: #{tpu_custom_call.1}
  #allocation0 [shape = 'u32[]', space=smem, size = 0x4, offset = 0x4, fixed_abs, tag = 'smem constant byte address 0x4 - core index']
  #allocation1 [shape = 'u32[72,128]{1,0:T(1,128)}', space=vmem, size = 0x9000, scoped, tag = 'internal scratch']
  %s0 = inlined_call_operand.vmem [shape: f32[16,1], index: 0, kind: input, shape index: {}]
  %s1 = inlined_call_operand.vmem [shape: f32[16,32], index: 1, kind: input, shape index: {}]
  %s2 = inlined_call_operand.vmem [shape: f32[2,8], index: 2, kind: input, shape index: {}]
  %s3 = inlined_call_operand.vmem [shape: f32[1,32], index: 3, kind: input, shape index: {}]
  %s4 = inlined_call_operand.vmem [shape: f32[1,32], index: 4, kind: input, shape index: {}]
  %s5 = inlined_call_operand.hbm [shape: f32[32,32], index: 5, kind: input, shape index: {}]
  %s6 = inlined_call_operand.vmem [shape: f32[1,32], index: 6, kind: input, shape index: {}]
  %s7 = inlined_call_operand.hbm [shape: f32[2,8], index: 7, kind: output, shape index: {}]
  %s8 = sld [smem:[#allocation0]]
  $region42: #{tpu_custom_call.1} parent=0
    _
  %s10 = ssub.s32 1, %s8
  %s11 = scalar_select 0, %s10, %s8
  $region1: #{tpu_custom_call.1} parent=0
    #allocation2 [shape = 'u8[16384]{0}', space=vmem, size = 0x4000, scoped, tag = 'input window, operand 5, single buffered']
    #allocation3 [shape = 's32[1]{0}', space=sflag, size = 0x4, scoped, tag = 'scoped memory for tpu_custom_call.1']
    #allocation4 [shape = 's32[1]{0}', space=sflag, size = 0x4, scoped, tag = 'scoped memory for tpu_custom_call.1']
    #allocation5 [shape = 'u8[1024]{0}', space=vmem, size = 0x400, scoped, tag = 'output window, operand 0, single buffered']
    %12 = vsyncpa [#allocation3], 0
    %13 = vsyncpa [#allocation4], 0
    // Predicated region
    $region2: #{tpu_custom_call.1} parent=1 // pred_check
      _
    $region3: #{tpu_custom_call.1} parent=1 // pred_check_branch
      %15 = sbr.rel (0) target = $region5
    $region4: #{tpu_custom_call.1} parent=1 // pred_region
      _
    $region5: #{tpu_custom_call.1} parent=1 // pred_fallthru
      _
    // Predicated region
    $region6: #{tpu_custom_call.1} parent=1 // pred_check
      _
    $region7: #{tpu_custom_call.1} parent=1 // pred_check_branch
      %17 = sbr.rel (0) target = $region9
    $region8: #{tpu_custom_call.1} parent=1 // pred_region
      _
    $region9: #{tpu_custom_call.1} parent=1 // pred_fallthru
      _
    // Predicated region
    $region10: #{tpu_custom_call.1} parent=1 // pred_check
      _
    $region11: #{tpu_custom_call.1} parent=1 // pred_check_branch
      %19 = sbr.rel (0) target = $region13
    $region12: #{tpu_custom_call.1} parent=1 // pred_region
      _
    $region13: #{tpu_custom_call.1} parent=1 // pred_fallthru
      _
    // Predicated region
    $region14: #{tpu_custom_call.1} parent=1 // pred_check
      _
    $region15: #{tpu_custom_call.1} parent=1 // pred_check_branch
      %21 = sbr.rel (0) target = $region17
    $region16: #{tpu_custom_call.1} parent=1 // pred_region
      _
    $region17: #{tpu_custom_call.1} parent=1 // pred_fallthru
      _
    // Predicated region
    $region18: #{tpu_custom_call.1} parent=1 // pred_check
      _
    $region19: #{tpu_custom_call.1} parent=1 // pred_check_branch
      %23 = sbr.rel (0) target = $region21
    $region20: #{tpu_custom_call.1} parent=1 // pred_region
      _
    $region21: #{tpu_custom_call.1} parent=1 // pred_fallthru
      _
    // Predicated region
    $region22: #{tpu_custom_call.1} parent=1 // pred_check
      _
    $region23: #{tpu_custom_call.1} parent=1 // pred_check_branch
      %25 = sbr.rel (0) target = $region25
    $region24: #{tpu_custom_call.1} parent=1 // pred_region
      %27 = vsyncadd [#allocation3], 0
      %s28 = sshll.u32 %s5, 4
      %s29 = int_to_ptr.hbm [resolvable:$true] %s28
      %s30 = sshll.u32 [#allocation2], 4
      %s31 = int_to_ptr.vmem [resolvable:$true] %s30
      %36 = dma.hbm_to_vmem [thread:$0]  %s29, 512, %s31, [#allocation3], 128, 128, 8
    $region25: #{tpu_custom_call.1} parent=1 // pred_fallthru
      _
    // Predicated region
    $region26: #{tpu_custom_call.1} parent=1 // pred_check
      _
    $region27: #{tpu_custom_call.1} parent=1 // pred_check_branch
      %38 = sbr.rel (0) target = $region29
    $region28: #{tpu_custom_call.1} parent=1 // pred_region
      _
    $region29: #{tpu_custom_call.1} parent=1 // pred_fallthru
      _
    // Predicated region
    $region30: #{tpu_custom_call.1} parent=1 // pred_check
      _
    $region31: #{tpu_custom_call.1} parent=1 // pred_check_branch
      %40 = sbr.rel (0) target = $region33
    $region32: #{tpu_custom_call.1} parent=1 // pred_region
      %42 = dma.done [#allocation3], 512
    $region33: #{tpu_custom_call.1} parent=1 // pred_fallthru
      _
    %v43 = vld [vmem:[%s0] sm:$0xff]
    %v44 = vld [vmem:[%s0 + $0x8] sm:$0xff]
    %v45 = vrcp.pop 180.0
    %v46 = vmul.f32 180.0, %v45
    %v47 = vsub.f32 1.0, %v46
    %v48 = vmul.f32 %v45, %v47
    %v49 = vadd.f32 %v45, %v48
    %vm50 = vweird.f32 %v45
    %v51 = vsel %vm50, %v45, %v49
    %v52 = vmul.f32 %v43, %v51
    %v53 = vmul.f32 %v44, %v51
    %v54 = vld [vmem:[%s3] sm:$0x1]
    %56 = vset.pattern.permute.xlu0 0
    %57 = vperm.xlu0 %56, %v52
    %v58 = vpop.permute.xlu0 %57
    %61 = vset.pattern.permute.xlu0 0
    %62 = vperm.xlu0 %61, %v53
    %v63 = vpop.permute.xlu0 %62
    %v66 = vperm.slane %v54, 0
    %v68 = vmul.f32 %v58, %v66
    %v69 = vmul.f32 %v63, %v66
    %v70 = vld [vmem:[%s4] sm:$0x1]
    %v72 = vperm.slane %v70, 0
    %v74 = vadd.f32 %v68, %v72
    %v75 = vadd.f32 %v69, %v72
    %v76 = vmul.f32 %v74, %v74
    %v77 = vmul.f32 %v75, %v75
    %v78 = vtanh.pop %v76
    %v79 = vtanh.pop %v77
    %v80 = vsub.f32 1.0, %v78
    %v81 = vsub.f32 1.0, %v79
    %v82 = vld [vmem:[#allocation2] sm:$0xff]
    %v83 = vld [vmem:[#allocation2 + $0x8] sm:$0xff]
    %v84 = vld [vmem:[#allocation2 + $0x10] sm:$0xff]
    %v85 = vld [vmem:[#allocation2 + $0x18] sm:$0xff]
    %v86 = vld [vmem:[%s6] sm:$0x1]
    %v88 = vperm.slane %v86, 0
    %vm90 = vcmask 261120
    %v92 = vsel %vm90, %v80, 0
    %v95 = vsel %vm90, %v81, 0
    %97 = vmatpush.msra.mxu0 0.0
    %98 = vmatpush.msra.mxu0 0.0
    %99 = vmatpush.msra.mxu0 0.0
    %100 = vmatpush.msra.mxu0 0.0
    %101 = vmatpush.msra.mxu0 0.0
    %102 = vmatpush.msra.mxu0 0.0
    %103 = vmatpush.msra.mxu0 0.0
    %104 = vmatpush.msra.mxu0 0.0
    %105 = vmatpush.msra.mxu0 0.0
    %106 = vmatpush.msra.mxu0 0.0
    %107 = vmatpush.msra.mxu0 0.0
    %108 = vmatpush.msra.mxu0 0.0
    %v109 = vand.u32 %v85, 4294901760
    %110 = vmatpush.msra.mxu0 %v109
    %v111 = vand.u32 %v84, 4294901760
    %112 = vmatpush.msra.mxu0 %v111
    %v113 = vand.u32 %v83, 4294901760
    %114 = vmatpush.msra.mxu0 %v113
    %v115 = vand.u32 %v82, 4294901760
    %116 = vmatpush.msra.mxu0 %v115
    %v117 = vand.u32 %v92, 4294901760
    %v118 = vsub.f32 %v92, %v117
    %v119 = vand.u32 %v118, 4294901760
    %v120 = vsub.f32 %v118, %v119
    %v121 = vand.u32 %v120, 4294901760
    %122 = vmatmul.f32.gmra.mxu0 %v121
    %v123 = vpop.f32.mrf.mxu0
    %v124 = vadd.f32 %v88, %v123
    %v125 = vand.u32 %v95, 4294901760
    %v126 = vsub.f32 %v95, %v125
    %v127 = vand.u32 %v126, 4294901760
    %v128 = vsub.f32 %v126, %v127
    %v129 = vand.u32 %v128, 4294901760
    %130 = vmatmul.f32.gmra.mxu0 %v129
    %v131 = vpop.f32.mrf.mxu0
    %v132 = vadd.f32 %v88, %v131
    %133 = vdwg.mxu0
    %134 = vmatpush.msra.mxu0 0.0
    %135 = vmatpush.msra.mxu0 0.0
    %136 = vmatpush.msra.mxu0 0.0
    %137 = vmatpush.msra.mxu0 0.0
    %138 = vmatpush.msra.mxu0 0.0
    %139 = vmatpush.msra.mxu0 0.0
    %140 = vmatpush.msra.mxu0 0.0
    %141 = vmatpush.msra.mxu0 0.0
    %142 = vmatpush.msra.mxu0 0.0
    %143 = vmatpush.msra.mxu0 0.0
    %144 = vmatpush.msra.mxu0 0.0
    %145 = vmatpush.msra.mxu0 0.0
    %v146 = vand.u32 %v85, 4294901760
    %v147 = vsub.f32 %v85, %v146
    %v148 = vand.u32 %v147, 4294901760
    %v149 = vsub.f32 %v147, %v148
    %v150 = vand.u32 %v149, 4294901760
    %151 = vmatpush.msra.mxu0 %v150
    %v152 = vand.u32 %v84, 4294901760
    %v153 = vsub.f32 %v84, %v152
    %v154 = vand.u32 %v153, 4294901760
    %v155 = vsub.f32 %v153, %v154
    %v156 = vand.u32 %v155, 4294901760
    %157 = vmatpush.msra.mxu0 %v156
    %v158 = vand.u32 %v83, 4294901760
    %v159 = vsub.f32 %v83, %v158
    %v160 = vand.u32 %v159, 4294901760
    %v161 = vsub.f32 %v159, %v160
    %v162 = vand.u32 %v161, 4294901760
    %163 = vmatpush.msra.mxu0 %v162
    %v164 = vand.u32 %v82, 4294901760
    %v165 = vsub.f32 %v82, %v164
    %v166 = vand.u32 %v165, 4294901760
    %v167 = vsub.f32 %v165, %v166
    %v168 = vand.u32 %v167, 4294901760
    %169 = vmatpush.msra.mxu0 %v168
    %v170 = vand.u32 %v92, 4294901760
    %171 = vmatmul.f32.gmra.mxu0 %v170
    %v172 = vpop.f32.mrf.mxu0
    %v173 = vadd.f32 %v124, %v172
    %v174 = vand.u32 %v95, 4294901760
    %175 = vmatmul.f32.gmra.mxu0 %v174
    %v176 = vpop.f32.mrf.mxu0
    %v177 = vadd.f32 %v132, %v176
    %178 = vdwg.mxu0
    %179 = vmatpush.msra.mxu0 0.0
    %180 = vmatpush.msra.mxu0 0.0
    %181 = vmatpush.msra.mxu0 0.0
    %182 = vmatpush.msra.mxu0 0.0
    %183 = vmatpush.msra.mxu0 0.0
    %184 = vmatpush.msra.mxu0 0.0
    %185 = vmatpush.msra.mxu0 0.0
    %186 = vmatpush.msra.mxu0 0.0
    %187 = vmatpush.msra.mxu0 0.0
    %188 = vmatpush.msra.mxu0 0.0
    %189 = vmatpush.msra.mxu0 0.0
    %190 = vmatpush.msra.mxu0 0.0
    %v191 = vand.u32 %v85, 4294901760
    %v192 = vsub.f32 %v85, %v191
    %193 = vmatpush.msra.mxu0 %v192
    %v194 = vand.u32 %v84, 4294901760
    %v195 = vsub.f32 %v84, %v194
    %196 = vmatpush.msra.mxu0 %v195
    %v197 = vand.u32 %v83, 4294901760
    %v198 = vsub.f32 %v83, %v197
    %199 = vmatpush.msra.mxu0 %v198
    %v200 = vand.u32 %v82, 4294901760
    %v201 = vsub.f32 %v82, %v200
    %202 = vmatpush.msra.mxu0 %v201
    %v203 = vand.u32 %v92, 4294901760
    %v204 = vsub.f32 %v92, %v203
    %205 = vmatmul.f32.gmra.mxu0 %v204
    %v206 = vpop.f32.mrf.mxu0
    %v207 = vadd.f32 %v173, %v206
    %v208 = vand.u32 %v95, 4294901760
    %v209 = vsub.f32 %v95, %v208
    %210 = vmatmul.f32.gmra.mxu0 %v209
    %v211 = vpop.f32.mrf.mxu0
    %v212 = vadd.f32 %v177, %v211
    %213 = vdwg.mxu0
    %214 = vmatpush.msra.mxu0 0.0
    %215 = vmatpush.msra.mxu0 0.0
    %216 = vmatpush.msra.mxu0 0.0
    %217 = vmatpush.msra.mxu0 0.0
    %218 = vmatpush.msra.mxu0 0.0
    %219 = vmatpush.msra.mxu0 0.0
    %220 = vmatpush.msra.mxu0 0.0
    %221 = vmatpush.msra.mxu0 0.0
    %222 = vmatpush.msra.mxu0 0.0
    %223 = vmatpush.msra.mxu0 0.0
    %224 = vmatpush.msra.mxu0 0.0
    %225 = vmatpush.msra.mxu0 0.0
    %v226 = vand.u32 %v85, 4294901760
    %227 = vmatpush.msra.mxu0 %v226
    %v228 = vand.u32 %v84, 4294901760
    %229 = vmatpush.msra.mxu0 %v228
    %v230 = vand.u32 %v83, 4294901760
    %231 = vmatpush.msra.mxu0 %v230
    %v232 = vand.u32 %v82, 4294901760
    %233 = vmatpush.msra.mxu0 %v232
    %v234 = vand.u32 %v92, 4294901760
    %v235 = vsub.f32 %v92, %v234
    %v236 = vand.u32 %v235, 4294901760
    %237 = vmatmul.f32.gmra.mxu0 %v236
    %v238 = vpop.f32.mrf.mxu0
    %v239 = vadd.f32 %v207, %v238
    %v240 = vand.u32 %v95, 4294901760
    %v241 = vsub.f32 %v95, %v240
    %v242 = vand.u32 %v241, 4294901760
    %243 = vmatmul.f32.gmra.mxu0 %v242
    %v244 = vpop.f32.mrf.mxu0
    %v245 = vadd.f32 %v212, %v244
    %246 = vdwg.mxu0
    %247 = vmatpush.msra.mxu0 0.0
    %248 = vmatpush.msra.mxu0 0.0
    %249 = vmatpush.msra.mxu0 0.0
    %250 = vmatpush.msra.mxu0 0.0
    %251 = vmatpush.msra.mxu0 0.0
    %252 = vmatpush.msra.mxu0 0.0
    %253 = vmatpush.msra.mxu0 0.0
    %254 = vmatpush.msra.mxu0 0.0
    %255 = vmatpush.msra.mxu0 0.0
    %256 = vmatpush.msra.mxu0 0.0
    %257 = vmatpush.msra.mxu0 0.0
    %258 = vmatpush.msra.mxu0 0.0
    %v259 = vand.u32 %v85, 4294901760
    %v260 = vsub.f32 %v85, %v259
    %v261 = vand.u32 %v260, 4294901760
    %262 = vmatpush.msra.mxu0 %v261
    %v263 = vand.u32 %v84, 4294901760
    %v264 = vsub.f32 %v84, %v263
    %v265 = vand.u32 %v264, 4294901760
    %266 = vmatpush.msra.mxu0 %v265
    %v267 = vand.u32 %v83, 4294901760
    %v268 = vsub.f32 %v83, %v267
    %v269 = vand.u32 %v268, 4294901760
    %270 = vmatpush.msra.mxu0 %v269
    %v271 = vand.u32 %v82, 4294901760
    %v272 = vsub.f32 %v82, %v271
    %v273 = vand.u32 %v272, 4294901760
    %274 = vmatpush.msra.mxu0 %v273
    %v275 = vand.u32 %v92, 4294901760
    %276 = vmatmul.f32.gmra.mxu0 %v275
    %v277 = vpop.f32.mrf.mxu0
    %v278 = vadd.f32 %v239, %v277
    %v279 = vand.u32 %v95, 4294901760
    %280 = vmatmul.f32.gmra.mxu0 %v279
    %v281 = vpop.f32.mrf.mxu0
    %v282 = vadd.f32 %v245, %v281
    %283 = vdwg.mxu0
    %284 = vmatpush.msra.mxu0 0.0
    %285 = vmatpush.msra.mxu0 0.0
    %286 = vmatpush.msra.mxu0 0.0
    %287 = vmatpush.msra.mxu0 0.0
    %288 = vmatpush.msra.mxu0 0.0
    %289 = vmatpush.msra.mxu0 0.0
    %290 = vmatpush.msra.mxu0 0.0
    %291 = vmatpush.msra.mxu0 0.0
    %292 = vmatpush.msra.mxu0 0.0
    %293 = vmatpush.msra.mxu0 0.0
    %294 = vmatpush.msra.mxu0 0.0
    %295 = vmatpush.msra.mxu0 0.0
    %v296 = vand.u32 %v85, 4294901760
    %297 = vmatpush.msra.mxu0 %v296
    %v298 = vand.u32 %v84, 4294901760
    %299 = vmatpush.msra.mxu0 %v298
    %v300 = vand.u32 %v83, 4294901760
    %301 = vmatpush.msra.mxu0 %v300
    %v302 = vand.u32 %v82, 4294901760
    %303 = vmatpush.msra.mxu0 %v302
    %v304 = vand.u32 %v92, 4294901760
    %305 = vmatmul.f32.gmra.mxu0 %v304
    %v306 = vpop.f32.mrf.mxu0
    %v307 = vadd.f32 %v278, %v306
    %v308 = vand.u32 %v95, 4294901760
    %309 = vmatmul.f32.gmra.mxu0 %v308
    %v310 = vpop.f32.mrf.mxu0
    %v311 = vadd.f32 %v282, %v310
    %312 = vdwg.mxu0
    %v313 = vmax.f32 %v307, 0.0
    %v314 = vmax.f32 %v311, 0.0
    %v315 = vld [vmem:[%s1] sm:$0xff]
    %v316 = vld [vmem:[%s1 + $0x8] sm:$0xff]
    %v317 = vmul.f32 %v313, %v315
    %v318 = vmul.f32 %v314, %v316
    %v319 = vsel %vm90, %v317, 0.0
    %320 = vadd.xlane.f32.xlu0 %v319
    %v321 = vpop.xlane.xlu0 %320
    %v322 = vsel %vm90, %v318, 0.0
    %323 = vadd.xlane.f32.xlu0 %v322
    %v324 = vpop.xlane.xlu0 %323
    %v325 = vmul.f32 %v321, 0.125
    %v326 = vmul.f32 %v324, 0.125
    %v327 = vld [vmem:[%s2] sm:$0x3]
    %vm328 = vcmp.ne.f32.partialorder %v327, 0.0
    %v331 = vlaneseq
    %v332 = vand.u32 %v331, 127
    %v333 = vperm.slane %v325, %v332
    %v334 = vperm.slane %v326, %v332
    %vm335 = vcmask 1041409
    %v336 = vsel %vm335, %v334, %v333
    %v338 = vsel %vm328, -3.4028235e+38, %v336
    %vm339 = vcmask 58368
    %v340 = vsel %vm339, %v338, -inf
    %341 = vmax.xlane.f32.xlu0 %v340
    %v342 = vpop.xlane.xlu0 %341
    %v343 = vsub.f32 %v338, %v342
    %v344 = vmul.f32 %v343, 1.442695
    %v345 = vpow.pop %v344
    %v346 = vsel %vm339, %v345, 0.0
    %347 = vadd.xlane.f32.xlu0 %v346
    %v348 = vpop.xlane.xlu0 %347
    %v349 = vrcp.pop %v348
    %v350 = vmul.f32 %v348, %v349
    %v351 = vsub.f32 1.0, %v350
    %v352 = vmul.f32 %v349, %v351
    %v353 = vadd.f32 %v349, %v352
    %vm354 = vweird.f32 %v348
    %vm355 = vweird.f32 %v349
    %vm356 = vmor %vm354, %vm355
    %v357 = vsel %vm356, %v349, %v353
    %v358 = vand.u32 2147483647, %v348
    %vm359 = vcmp.eq.f32.partialorder %v358, 8.507059e+37
    %v360 = vand.u32 %v348, 2147483648
    %v361 = vor.u32 1.1754944e-38, %v360
    %v362 = vsel %vm359, %v361, %v357
    %v363 = vmul.f32 %v345, %v362
    %364 = vst.msk [vmem:[#allocation5] sm:$0x3] %vm339, %v363
    // Predicated region
    $region34: #{tpu_custom_call.1} parent=1 // pred_check
      _
    $region35: #{tpu_custom_call.1} parent=1 // pred_check_branch
      %366 = sbr.rel (0) target = $region37
    $region36: #{tpu_custom_call.1} parent=1 // pred_region
      %368 = vsyncadd [#allocation4], 0
      %s370 = sshll.u32 [#allocation5], 4
      %s371 = int_to_ptr.vmem [resolvable:$true] %s370
      %s372 = sshll.u32 %s7, 4
      %s373 = int_to_ptr.hbm [resolvable:$true] %s372
      %375 = dma.vmem_to_hbm [thread:$0]  %s371, 32, %s373, [#allocation4]
    $region37: #{tpu_custom_call.1} parent=1 // pred_fallthru
      _
    // Predicated region
    $region38: #{tpu_custom_call.1} parent=1 // pred_check
      _
    $region39: #{tpu_custom_call.1} parent=1 // pred_check_branch
      %377 = sbr.rel (0) target = $region41
    $region40: #{tpu_custom_call.1} parent=1 // pred_region
      %379 = dma.done [#allocation4], 32
    $region41: #{tpu_custom_call.1} parent=1 // pred_fallthru
      _
    %380 = vsyncpa [#allocation3], 1
    %381 = vsyncpa [#allocation4], 1

</llo_original>
